<compile_context>
chip_gen: v5e
topology: v5e:2x2
jax: 0.10.0
libtpu: 0.0.40
codegen_flags: <defaults>
</compile_context>

<pallas_src>
import functools

import jax
import jax.numpy as jnp
from jax.experimental import pallas as pl
from jax.experimental.pallas import tpu as pltpu


def _round_up(a, b):
    return ((a + b - 1) // b) * b


def _tpu_vmem_capacity_bytes():
    """Physical VMEM of the current chip (conservative fallback = v7x's 64 MiB)."""
    try:
        info = pltpu.get_tpu_info()
        cap = getattr(info, "vmem_capacity_bytes", None)
        if cap:
            return int(cap)
    except Exception:
        pass
    return 64 << 20


def _const_spec(shape, index_map):
    """BlockSpec whose block index never changes: single-buffer it when supported
    (halves weight VMEM); otherwise fall back to the default double buffering."""
    if hasattr(pl, "Buffered"):
        try:
            return pl.BlockSpec(shape, index_map, pipeline_mode=pl.Buffered(1))
        except Exception:
            pass
    return pl.BlockSpec(shape, index_map)


def _layernorm(x_f32, g_ref, b_ref, dim, eps):
    """LayerNorm over the first `dim` lanes of a zero-padded (tm, dim_pad) f32 tile.
    gamma/beta are zero in the padded lanes, so padded lanes stay exactly 0."""
    lane = jax.lax.broadcasted_iota(jnp.int32, x_f32.shape, 1)
    mask = lane < dim
    mu = jnp.sum(x_f32, axis=-1, keepdims=True) * (1.0 / dim)
    d = jnp.where(mask, x_f32 - mu, 0.0)
    var = jnp.sum(d * d, axis=-1, keepdims=True) * (1.0 / dim)
    inv = jax.lax.rsqrt(var + eps)
    return d * inv * g_ref[...].astype(jnp.float32) + b_ref[...].astype(jnp.float32)


# ----------------------------------------------------------------------------
# Kernel 1: full (padded) hidden dimension resident in VMEM.
# ----------------------------------------------------------------------------
def _ff_block_kernel(x_ref, g_ref, be_ref, w1_ref, b1_ref, w2_ref, b2_ref, o_ref,
                     *, dim, eps, apply_norm, add_residual, mxu_dtype):
    x = x_ref[...].astype(jnp.float32)
    xn = _layernorm(x, g_ref, be_ref, dim, eps) if apply_norm else x
    # Linear 1 (MXU, f32 accumulation), bias + ReLU on the f32 accumulator.
    h = jnp.dot(xn.astype(mxu_dtype), w1_ref[...].astype(mxu_dtype),
                preferred_element_type=jnp.float32)
    h = jnp.maximum(h + b1_ref[...].astype(jnp.float32), 0.0)
    # Dropout(0.2): identity (eval mode).
    # Linear 2.
    y = jnp.dot(h.astype(mxu_dtype), w2_ref[...].astype(mxu_dtype),
                preferred_element_type=jnp.float32)
    y = y + b2_ref[...].astype(jnp.float32)
    # Dropout(0.2): identity (eval mode).
    if add_residual:
        y = y + x
    o_ref[...] = y.astype(o_ref.dtype)


# ----------------------------------------------------------------------------
# Kernel 2: hidden dimension tiled (reduction axis), f32 scratch accumulator.
# LayerNorm is computed once per row tile (at j == 0) into a VMEM scratch.
# ----------------------------------------------------------------------------
def _ff_block_kernel_hidden_tiled(x_ref, g_ref, be_ref, w1_ref, b1_ref, w2_ref,
                                  b2_ref, o_ref, xn_ref, acc_ref,
                                  *, dim, eps, apply_norm, add_residual, mxu_dtype):
    j = pl.program_id(1)

    @pl.when(j == 0)
    def _():
        x = x_ref[...].astype(jnp.float32)
        xn_ref[...] = _layernorm(x, g_ref, be_ref, dim, eps) if apply_norm else x
        acc_ref[...] = jnp.zeros_like(acc_ref)

    h = jnp.dot(xn_ref[...].astype(mxu_dtype), w1_ref[...].astype(mxu_dtype),
                preferred_element_type=jnp.float32)
    h = jnp.maximum(h + b1_ref[...].astype(jnp.float32), 0.0)
    # Dropout(0.2): identity (eval mode).
    acc_ref[...] += jnp.dot(h.astype(mxu_dtype), w2_ref[...].astype(mxu_dtype),
                            preferred_element_type=jnp.float32)

    @pl.when(j == pl.num_programs(1) - 1)
    def _():
        y = acc_ref[...] + b2_ref[...].astype(jnp.float32)      # b2 added exactly once
        if add_residual:
            y = y + x_ref[...].astype(jnp.float32)
        # Dropout(0.2): identity (eval mode).
        o_ref[...] = y.astype(o_ref.dtype)


@functools.partial(
    jax.jit,
    static_argnames=("apply_norm", "add_residual", "eps", "tm", "th", "mxu_dtype"))
def ctdff_ff_block(x, gamma, beta, w1, b1, w2, b2, *,
                   apply_norm=True, add_residual=True, eps=1e-5,
                   tm=None, th=None, mxu_dtype=jnp.bfloat16):
    """CTDFF FF stage:  out = x + FFN(LayerNorm(x))   (eval-mode dropout).

    x: (B, S, dim); gamma/beta: (dim,); w1 = torch W1.T: (dim, hidden); b1: (hidden,);
    w2 = torch W2.T: (hidden, dim); b2: (dim,).
    Set apply_norm=False / add_residual=False for plain FeedForward semantics.
    """
    B, S, dim = x.shape
    hidden = w1.shape[1]
    M = B * S

    dim_pad = _round_up(dim, 128)
    hidden_pad = _round_up(hidden, 128)

    # --- Row tile: multiple of 16 (bf16 sublane packing); big for MXU occupancy but
    #     capped so the "parallel" M axis has >= 2 steps (v7x has 2 TensorCores). ---
    if tm is None:
        tm = 512
        if M > 32:
            tm = min(tm, _round_up((M + 1) // 2, 16))
    tm = max(16, _round_up(min(tm, _round_up(M, 16)), 16))
    M_pad = _round_up(M, tm)
    grid_m = M_pad // tm

    # --- Zero-pad everything to lane-dense shapes (output sliced back at the end). ---
    f32 = jnp.float32
    x2d = jnp.pad(x.reshape(M, dim), ((0, M_pad - M), (0, dim_pad - dim)))
    g2d = jnp.pad(gamma.reshape(1, dim).astype(f32), ((0, 0), (0, dim_pad - dim)))
    be2d = jnp.pad(beta.reshape(1, dim).astype(f32), ((0, 0), (0, dim_pad - dim)))
    w1p = jnp.pad(w1, ((0, dim_pad - dim), (0, hidden_pad - hidden))).astype(mxu_dtype)
    b1p = jnp.pad(b1.reshape(1, hidden).astype(f32), ((0, 0), (0, hidden_pad - hidden)))
    w2p = jnp.pad(w2, ((0, hidden_pad - hidden), (0, dim_pad - dim))).astype(mxu_dtype)
    b2p = jnp.pad(b2.reshape(1, dim).astype(f32), ((0, 0), (0, dim_pad - dim)))

    x_isz = x.dtype.itemsize
    w_isz = jnp.dtype(mxu_dtype).itemsize
    phys_vmem = _tpu_vmem_capacity_bytes()

    # --- Resident-path VMEM estimate: single-buffered weights, double-buffered x/out
    #     tiles, f32 intermediates (xn, h, y).  Tile hidden if it exceeds the budget. ---
    resident_est = (
        2 * dim_pad * hidden_pad * w_isz             # w1 + w2 (Buffered(1))
        + (hidden_pad + 3 * dim_pad) * 4             # b1, b2, gamma, beta
        + 2 * 2 * tm * dim_pad * x_isz               # x + out tiles, double-buffered
        + tm * hidden_pad * 4                        # h (f32)
        + 2 * tm * dim_pad * 4)                      # xn + y (f32)
    if th is None and resident_est > int(0.6 * phys_vmem):
        th = 128                                     # hidden_pad is always a 128 multiple
        for cand in (4096, 2048, 1024, 512, 256):
            if cand < hidden_pad and hidden_pad % cand == 0:
                th = cand
                break
    if th is not None:
        th = min(_round_up(th, 128), hidden_pad)
        if hidden_pad % th != 0:
            th = 128
        if th >= hidden_pad:
            th = None                                # nothing to tile

    eff_h = th if th is not None else hidden_pad
    vmem_est = (
        2 * 2 * tm * dim_pad * x_isz
        + (2 if th is not None else 1) * 2 * dim_pad * eff_h * w_isz
        + (eff_h + 3 * dim_pad) * 4
        + tm * eff_h * 4 + 2 * tm * dim_pad * 4
        + (2 * tm * dim_pad * 4 if th is not None else 0))     # xn/acc scratch
    vmem_limit = int(min(max(2 * vmem_est, 16 << 20), phys_vmem - (8 << 20)))
    vmem_limit = max(vmem_limit, 8 << 20)

    cost = pl.CostEstimate(
        flops=4 * M_pad * dim_pad * hidden_pad,
        transcendentals=M_pad if apply_norm else 0,
        bytes_accessed=int(2 * M_pad * dim_pad * x_isz
                           + 2 * dim_pad * hidden_pad * w_isz
                           + (hidden_pad + 3 * dim_pad) * 4),
    )

    out_dtype = x.dtype
    if th is None:
        # ------------------ fully-resident-weights path ------------------
        kernel = functools.partial(
            _ff_block_kernel, dim=dim, eps=eps, apply_norm=apply_norm,
            add_residual=add_residual, mxu_dtype=mxu_dtype)
        out2d = pl.pallas_call(
            kernel,
            out_shape=jax.ShapeDtypeStruct((M_pad, dim_pad), out_dtype),
            grid_spec=pltpu.PrefetchScalarGridSpec(
                num_scalar_prefetch=0,
                grid=(grid_m,),
                in_specs=[
                    pl.BlockSpec((tm, dim_pad), lambda i: (i, 0)),          # x tile
                    _const_spec((1, dim_pad), lambda i: (0, 0)),            # gamma
                    _const_spec((1, dim_pad), lambda i: (0, 0)),            # beta
                    _const_spec((dim_pad, hidden_pad), lambda i: (0, 0)),   # W1 (full)
                    _const_spec((1, hidden_pad), lambda i: (0, 0)),         # b1
                    _const_spec((hidden_pad, dim_pad), lambda i: (0, 0)),   # W2 (full)
                    _const_spec((1, dim_pad), lambda i: (0, 0)),            # b2
                ],
                out_specs=pl.BlockSpec((tm, dim_pad), lambda i: (i, 0)),
            ),
            compiler_params=pltpu.CompilerParams(
                dimension_semantics=("parallel",),
                vmem_limit_bytes=vmem_limit,
            ),
            cost_estimate=cost,
        )(x2d, g2d, be2d, w1p, b1p, w2p, b2p)
    else:
        # ------------------ hidden-tiled reduction path ------------------
        kernel = functools.partial(
            _ff_block_kernel_hidden_tiled, dim=dim, eps=eps, apply_norm=apply_norm,
            add_residual=add_residual, mxu_dtype=mxu_dtype)
        out2d = pl.pallas_call(
            kernel,
            out_shape=jax.ShapeDtypeStruct((M_pad, dim_pad), out_dtype),
            grid_spec=pltpu.PrefetchScalarGridSpec(
                num_scalar_prefetch=0,
                grid=(grid_m, hidden_pad // th),
                in_specs=[
                    pl.BlockSpec((tm, dim_pad), lambda i, j: (i, 0)),        # x tile
                    _const_spec((1, dim_pad), lambda i, j: (0, 0)),          # gamma
                    _const_spec((1, dim_pad), lambda i, j: (0, 0)),          # beta
                    pl.BlockSpec((dim_pad, th), lambda i, j: (0, j)),        # W1 columns
                    pl.BlockSpec((1, th), lambda i, j: (0, j)),              # b1 slice
                    pl.BlockSpec((th, dim_pad), lambda i, j: (j, 0)),        # W2 rows
                    _const_spec((1, dim_pad), lambda i, j: (0, 0)),          # b2
                ],
                out_specs=pl.BlockSpec((tm, dim_pad), lambda i, j: (i, 0)),
                scratch_shapes=[pltpu.VMEM((tm, dim_pad), jnp.float32),      # xn
                                pltpu.VMEM((tm, dim_pad), jnp.float32)],     # acc
            ),
            compiler_params=pltpu.CompilerParams(
                dimension_semantics=("parallel", "arbitrary"),
                vmem_limit_bytes=vmem_limit,
            ),
            cost_estimate=cost,
        )(x2d, g2d, be2d, w1p, b1p, w2p, b2p)

    return out2d[:M, :dim].reshape(B, S, dim)


def _reference(x, gamma, beta, w1, b1, w2, b2, *, apply_norm=True,
               add_residual=True, eps=1e-5):
    xn = x
    if apply_norm:
        mu = jnp.mean(x, axis=-1, keepdims=True)
        var = jnp.mean((x - mu) ** 2, axis=-1, keepdims=True)
        xn = (x - mu) / jnp.sqrt(var + eps) * gamma + beta
    h = jnp.maximum(jnp.einsum("bsd,dh->bsh", xn, w1) + b1, 0.0)
    y = jnp.einsum("bsh,hd->bsd", h, w2) + b2
    return y + x if add_residual else y


if __name__ == "__main__":
    keys = jax.random.split(jax.random.PRNGKey(0), 16)

    # ---- CTDFF's PreNorm(72, FeedForward(72, 144)) stage: out = x + FF(LN(x)).
    B, S, dim, hidden = 2, 16, 72, 144
    x = jax.random.normal(keys[0], (B, S, dim), dtype=jnp.float32)
    gamma = 1.0 + 0.1 * jax.random.normal(keys[1], (dim,), dtype=jnp.float32)
    beta = 0.1 * jax.random.normal(keys[2], (dim,), dtype=jnp.float32)
    bound1 = 1.0 / (dim ** 0.5)
    bound2 = 1.0 / (hidden ** 0.5)
    w1 = jax.random.uniform(keys[3], (dim, hidden), jnp.float32, -bound1, bound1)
    b1 = jax.random.uniform(keys[4], (hidden,), jnp.float32, -bound1, bound1)
    w2 = jax.random.uniform(keys[5], (hidden, dim), jnp.float32, -bound2, bound2)
    b2 = jax.random.uniform(keys[6], (dim,), jnp.float32, -bound2, bound2)

    ref = _reference(x, gamma, beta, w1, b1, w2, b2)

    # (a) exact f32 MXU operands -> tight tolerance.
    out_f32 = ctdff_ff_block(x, gamma, beta, w1, b1, w2, b2, mxu_dtype=jnp.float32)
    jax.block_until_ready(out_f32)
    assert out_f32.shape == (B, S, dim)
    assert jnp.allclose(out_f32, ref, atol=1e-3, rtol=1e-3), "f32 path mismatch"

    # (b) default bf16 MXU operands (f32 accumulation) -> looser tolerance.
    out_bf16 = ctdff_ff_block(x, gamma, beta, w1, b1, w2, b2)
    jax.block_until_ready(out_bf16)
    assert jnp.allclose(out_bf16, ref, atol=5e-2, rtol=5e-2), "bf16 path mismatch"

    # ---- Plain FeedForward semantics (no norm, no residual), f32 operands.
    out_ff = ctdff_ff_block(x, gamma, beta, w1, b1, w2, b2,
                            apply_norm=False, add_residual=False,
                            mxu_dtype=jnp.float32)
    jax.block_until_ready(out_ff)
    ref_ff = _reference(x, gamma, beta, w1, b1, w2, b2,
                        apply_norm=False, add_residual=False)
    assert jnp.allclose(out_ff, ref_ff, atol=1e-3, rtol=1e-3), "FF-only mismatch"

    # ---- Exercise the hidden-tiled reduction path (th < hidden_pad).
    B2, S2, dim2, hidden2 = 2, 24, 128, 384
    c1 = 1.0 / (dim2 ** 0.5)
    c2 = 1.0 / (hidden2 ** 0.5)
    x2 = jax.random.normal(keys[7], (B2, S2, dim2), dtype=jnp.float32)
    g2 = 1.0 + 0.1 * jax.random.normal(keys[8], (dim2,), dtype=jnp.float32)
    be2 = 0.1 * jax.random.normal(keys[9], (dim2,), dtype=jnp.float32)
    w1b = jax.random.uniform(keys[10], (dim2, hidden2), jnp.float32, -c1, c1)
    b1b = jax.random.uniform(keys[11], (hidden2,), jnp.float32, -c1, c1)
    w2b = jax.random.uniform(keys[12], (hidden2, dim2), jnp.float32, -c2, c2)
    b2b = jax.random.uniform(keys[13], (dim2,), jnp.float32, -c2, c2)

    out2 = ctdff_ff_block(x2, g2, be2, w1b, b1b, w2b, b2b, th=128,
                          mxu_dtype=jnp.float32)
    jax.block_until_ready(out2)
    ref2 = _reference(x2, g2, be2, w1b, b1b, w2b, b2b)
    assert out2.shape == (B2, S2, dim2)
    assert jnp.allclose(out2, ref2, atol=1e-3, rtol=1e-3), "tiled path mismatch"

    print("KERNEL_OK")
</pallas_src>

<mosaic_0001>
module attributes {stable_mosaic.version = 11 : i64} {
  func.func @_ff_block_kernel(%arg0: i32, %arg1: memref<32x128xf32, #tpu.memory_space<vmem>>, %arg2: memref<1x128xf32, #tpu.memory_space<vmem>>, %arg3: memref<1x128xf32, #tpu.memory_space<vmem>>, %arg4: memref<128x256xf32, #tpu.memory_space<vmem>>, %arg5: memref<1x256xf32, #tpu.memory_space<vmem>>, %arg6: memref<256x128xf32, #tpu.memory_space<vmem>>, %arg7: memref<1x128xf32, #tpu.memory_space<vmem>>, %arg8: memref<32x128xf32, #tpu.memory_space<vmem>>) attributes {dimension_semantics = [#tpu.dimension_semantics<parallel>], iteration_bounds = array<i64: 1>, scalar_prefetch = 0 : i64, scratch_operands = 0 : i64, tpu.core_type = #tpu.core_type<tc>, window_params = [{transform_indices = @transform_0, window_bounds = array<i64: 32, 128>}, {pipeline_mode = #tpu.pipeline_mode<synchronous>, transform_indices = @transform_1, window_bounds = array<i64: 1, 128>}, {pipeline_mode = #tpu.pipeline_mode<synchronous>, transform_indices = @transform_2, window_bounds = array<i64: 1, 128>}, {pipeline_mode = #tpu.pipeline_mode<synchronous>, transform_indices = @transform_3, window_bounds = array<i64: 128, 256>}, {pipeline_mode = #tpu.pipeline_mode<synchronous>, transform_indices = @transform_4, window_bounds = array<i64: 1, 256>}, {pipeline_mode = #tpu.pipeline_mode<synchronous>, transform_indices = @transform_5, window_bounds = array<i64: 256, 128>}, {pipeline_mode = #tpu.pipeline_mode<synchronous>, transform_indices = @transform_6, window_bounds = array<i64: 1, 128>}, {transform_indices = @transform_7, window_bounds = array<i64: 32, 128>}]} {
    %c0 = arith.constant 0 : index
    %c0_0 = arith.constant 0 : index
    %0 = vector.load %arg1[%c0, %c0_0] : memref<32x128xf32, #tpu.memory_space<vmem>>, vector<32x128xf32>
    %1 = tpu.iota {dimensions = array<i32: 1>} : vector<32x128xi32>
    %c72_i32 = arith.constant 72 : i32
    %2 = vector.broadcast %c72_i32 : i32 to vector<32x128xi32>
    %3 = arith.cmpi slt, %1, %2 : vector<32x128xi32>
    %cst = arith.constant dense<0.000000e+00> : vector<32xf32>
    %4 = vector.multi_reduction <add>, %0, %cst [1] : vector<32x128xf32> to vector<32xf32>
    %5 = vector.shape_cast %4 : vector<32xf32> to vector<32x1xf32>
    %cst_1 = arith.constant 0.013888889 : f32
    %6 = vector.broadcast %cst_1 : f32 to vector<32x1xf32>
    %7 = arith.mulf %5, %6 : vector<32x1xf32>
    %8 = vector.broadcast %7 : vector<32x1xf32> to vector<32x128xf32>
    %9 = arith.subf %0, %8 : vector<32x128xf32>
    %cst_2 = arith.constant 0.000000e+00 : f32
    %10 = vector.broadcast %cst_2 : f32 to vector<32x128xf32>
    %11 = arith.select %3, %9, %10 : vector<32x128xi1>, vector<32x128xf32>
    %12 = arith.mulf %11, %11 : vector<32x128xf32>
    %cst_3 = arith.constant dense<0.000000e+00> : vector<32xf32>
    %13 = vector.multi_reduction <add>, %12, %cst_3 [1] : vector<32x128xf32> to vector<32xf32>
    %14 = vector.shape_cast %13 : vector<32xf32> to vector<32x1xf32>
    %cst_4 = arith.constant 0.013888889 : f32
    %15 = vector.broadcast %cst_4 : f32 to vector<32x1xf32>
    %16 = arith.mulf %14, %15 : vector<32x1xf32>
    %cst_5 = arith.constant 9.99999974E-6 : f32
    %17 = vector.broadcast %cst_5 : f32 to vector<32x1xf32>
    %18 = arith.addf %16, %17 : vector<32x1xf32>
    %19 = math.rsqrt %18 : vector<32x1xf32>
    %20 = vector.broadcast %19 : vector<32x1xf32> to vector<32x128xf32>
    %21 = arith.mulf %11, %20 : vector<32x128xf32>
    %c0_6 = arith.constant 0 : index
    %c0_7 = arith.constant 0 : index
    %22 = vector.load %arg2[%c0_6, %c0_7] : memref<1x128xf32, #tpu.memory_space<vmem>>, vector<1x128xf32>
    %23 = vector.broadcast %22 : vector<1x128xf32> to vector<32x128xf32>
    %24 = arith.mulf %21, %23 : vector<32x128xf32>
    %c0_8 = arith.constant 0 : index
    %c0_9 = arith.constant 0 : index
    %25 = vector.load %arg3[%c0_8, %c0_9] : memref<1x128xf32, #tpu.memory_space<vmem>>, vector<1x128xf32>
    %26 = vector.broadcast %25 : vector<1x128xf32> to vector<32x128xf32>
    %27 = arith.addf %24, %26 : vector<32x128xf32>
    %c0_10 = arith.constant 0 : index
    %c0_11 = arith.constant 0 : index
    %28 = vector.load %arg4[%c0_10, %c0_11] : memref<128x256xf32, #tpu.memory_space<vmem>>, vector<128x256xf32>
    %cst_12 = arith.constant dense<0.000000e+00> : vector<32x256xf32>
    %29 = tpu.matmul %27, %28, %cst_12 {dimension_numbers = #tpu.dot_dimension_numbers<[1], [0], [0], [1], [0, 0, 1, 1], [], []>} : vector<32x128xf32>, vector<128x256xf32>, vector<32x256xf32> -> vector<32x256xf32>
    %c0_13 = arith.constant 0 : index
    %c0_14 = arith.constant 0 : index
    %30 = vector.load %arg5[%c0_13, %c0_14] : memref<1x256xf32, #tpu.memory_space<vmem>>, vector<1x256xf32>
    %31 = vector.broadcast %30 : vector<1x256xf32> to vector<32x256xf32>
    %32 = arith.addf %29, %31 : vector<32x256xf32>
    %cst_15 = arith.constant 0.000000e+00 : f32
    %33 = vector.broadcast %cst_15 : f32 to vector<32x256xf32>
    %34 = arith.maximumf %32, %33 : vector<32x256xf32>
    %c0_16 = arith.constant 0 : index
    %c0_17 = arith.constant 0 : index
    %35 = vector.load %arg6[%c0_16, %c0_17] : memref<256x128xf32, #tpu.memory_space<vmem>>, vector<256x128xf32>
    %cst_18 = arith.constant dense<0.000000e+00> : vector<32x128xf32>
    %36 = tpu.matmul %34, %35, %cst_18 {dimension_numbers = #tpu.dot_dimension_numbers<[1], [0], [0], [1], [0, 0, 1, 1], [], []>} : vector<32x256xf32>, vector<256x128xf32>, vector<32x128xf32> -> vector<32x128xf32>
    %c0_19 = arith.constant 0 : index
    %c0_20 = arith.constant 0 : index
    %37 = vector.load %arg7[%c0_19, %c0_20] : memref<1x128xf32, #tpu.memory_space<vmem>>, vector<1x128xf32>
    %38 = vector.broadcast %37 : vector<1x128xf32> to vector<32x128xf32>
    %39 = arith.addf %36, %38 : vector<32x128xf32>
    %40 = arith.addf %39, %0 : vector<32x128xf32>
    %c0_21 = arith.constant 0 : index
    %c0_22 = arith.constant 0 : index
    %41 = vector.load %arg8[%c0_21, %c0_22] : memref<32x128xf32, #tpu.memory_space<vmem>>, vector<32x128xf32>
    tpu.vector_store %arg8[%c0_21, %c0_22], %40 {strides = array<i32>} : memref<32x128xf32, #tpu.memory_space<vmem>>, vector<32x128xf32>,
    return
  }
  func.func @transform_0(%arg0: i32) -> (i32, i32) {
    %c0_i32 = arith.constant 0 : i32
    %c0_i32_0 = arith.constant 0 : i32
    return %arg0, %c0_i32 : i32, i32
  }
  func.func @transform_1(%arg0: i32) -> (i32, i32) {
    %c0_i32 = arith.constant 0 : i32
    %c0_i32_0 = arith.constant 0 : i32
    %c0_i32_1 = arith.constant 0 : i32
    return %c0_i32, %c0_i32_0 : i32, i32
  }
  func.func @transform_2(%arg0: i32) -> (i32, i32) {
    %c0_i32 = arith.constant 0 : i32
    %c0_i32_0 = arith.constant 0 : i32
    %c0_i32_1 = arith.constant 0 : i32
    return %c0_i32, %c0_i32_0 : i32, i32
  }
  func.func @transform_3(%arg0: i32) -> (i32, i32) {
    %c0_i32 = arith.constant 0 : i32
    %c0_i32_0 = arith.constant 0 : i32
    %c0_i32_1 = arith.constant 0 : i32
    return %c0_i32, %c0_i32_0 : i32, i32
  }
  func.func @transform_4(%arg0: i32) -> (i32, i32) {
    %c0_i32 = arith.constant 0 : i32
    %c0_i32_0 = arith.constant 0 : i32
    %c0_i32_1 = arith.constant 0 : i32
    return %c0_i32, %c0_i32_0 : i32, i32
  }
  func.func @transform_5(%arg0: i32) -> (i32, i32) {
    %c0_i32 = arith.constant 0 : i32
    %c0_i32_0 = arith.constant 0 : i32
    %c0_i32_1 = arith.constant 0 : i32
    return %c0_i32, %c0_i32_0 : i32, i32
  }
  func.func @transform_6(%arg0: i32) -> (i32, i32) {
    %c0_i32 = arith.constant 0 : i32
    %c0_i32_0 = arith.constant 0 : i32
    %c0_i32_1 = arith.constant 0 : i32
    return %c0_i32, %c0_i32_0 : i32, i32
  }
  func.func @transform_7(%arg0: i32) -> (i32, i32) {
    %c0_i32 = arith.constant 0 : i32
    %c0_i32_0 = arith.constant 0 : i32
    return %arg0, %c0_i32 : i32, i32
  }
}

</mosaic_0001>

<llo_original>
// kernel: ctdff_ff_block.1
$region0: #{ctdff_ff_block.1}
  #allocation0 [shape = 'u32[]', space=smem, size = 0x4, offset = 0x4, fixed_abs, tag = 'smem constant byte address 0x4 - core index']
  #allocation1 [shape = 'u32[72,128]{1,0:T(1,128)}', space=vmem, size = 0x9000, scoped, tag = 'internal scratch']
  %s0 = inlined_call_operand.vmem [shape: f32[32,128], index: 0, kind: input, shape index: {}]
  %s1 = inlined_call_operand.vmem [shape: f32[1,128], index: 1, kind: input, shape index: {}]
  %s2 = inlined_call_operand.vmem [shape: f32[1,128], index: 2, kind: input, shape index: {}]
  %s3 = inlined_call_operand.vmem [shape: f32[128,256], index: 3, kind: input, shape index: {}]
  %s4 = inlined_call_operand.vmem [shape: f32[1,256], index: 4, kind: input, shape index: {}]
  %s5 = inlined_call_operand.vmem [shape: f32[256,128], index: 5, kind: input, shape index: {}]
  %s6 = inlined_call_operand.vmem [shape: f32[1,128], index: 6, kind: input, shape index: {}]
  %s7 = inlined_call_operand.hbm [shape: f32[32,128], index: 7, kind: output, shape index: {}]
  %s8 = sld [smem:[#allocation0]]
  $region38: #{ctdff_ff_block.1} parent=0
    _
  %s10 = ssub.s32 1, %s8
  %s11 = scalar_select 0, %s10, %s8
  $region1: #{ctdff_ff_block.1} parent=0
    #allocation2 [shape = 'u8[16384]{0}', space=vmem, size = 0x4000, scoped, tag = 'output window, operand 0, single buffered']
    #allocation3 [shape = 's32[1]{0}', space=sflag, size = 0x4, scoped, tag = 'scoped memory for ctdff_ff_block.1']
    %12 = vsyncpa [#allocation3], 0
    // Predicated region
    $region2: #{ctdff_ff_block.1} parent=1 // pred_check
      _
    $region3: #{ctdff_ff_block.1} parent=1 // pred_check_branch
      %14 = sbr.rel (0) target = $region5
    $region4: #{ctdff_ff_block.1} parent=1 // pred_region
      _
    $region5: #{ctdff_ff_block.1} parent=1 // pred_fallthru
      _
    // Predicated region
    $region6: #{ctdff_ff_block.1} parent=1 // pred_check
      _
    $region7: #{ctdff_ff_block.1} parent=1 // pred_check_branch
      %16 = sbr.rel (0) target = $region9
    $region8: #{ctdff_ff_block.1} parent=1 // pred_region
      _
    $region9: #{ctdff_ff_block.1} parent=1 // pred_fallthru
      _
    // Predicated region
    $region10: #{ctdff_ff_block.1} parent=1 // pred_check
      _
    $region11: #{ctdff_ff_block.1} parent=1 // pred_check_branch
      %18 = sbr.rel (0) target = $region13
    $region12: #{ctdff_ff_block.1} parent=1 // pred_region
      _
    $region13: #{ctdff_ff_block.1} parent=1 // pred_fallthru
      _
    // Predicated region
    $region14: #{ctdff_ff_block.1} parent=1 // pred_check
      _
    $region15: #{ctdff_ff_block.1} parent=1 // pred_check_branch
      %20 = sbr.rel (0) target = $region17
    $region16: #{ctdff_ff_block.1} parent=1 // pred_region
      _
    $region17: #{ctdff_ff_block.1} parent=1 // pred_fallthru
      _
    // Predicated region
    $region18: #{ctdff_ff_block.1} parent=1 // pred_check
      _
    $region19: #{ctdff_ff_block.1} parent=1 // pred_check_branch
      %22 = sbr.rel (0) target = $region21
    $region20: #{ctdff_ff_block.1} parent=1 // pred_region
      _
    $region21: #{ctdff_ff_block.1} parent=1 // pred_fallthru
      _
    // Predicated region
    $region22: #{ctdff_ff_block.1} parent=1 // pred_check
      _
    $region23: #{ctdff_ff_block.1} parent=1 // pred_check_branch
      %24 = sbr.rel (0) target = $region25
    $region24: #{ctdff_ff_block.1} parent=1 // pred_region
      _
    $region25: #{ctdff_ff_block.1} parent=1 // pred_fallthru
      _
    // Predicated region
    $region26: #{ctdff_ff_block.1} parent=1 // pred_check
      _
    $region27: #{ctdff_ff_block.1} parent=1 // pred_check_branch
      %26 = sbr.rel (0) target = $region29
    $region28: #{ctdff_ff_block.1} parent=1 // pred_region
      _
    $region29: #{ctdff_ff_block.1} parent=1 // pred_fallthru
      _
    %v27 = vld [vmem:[%s0] sm:$0xff]
    %v28 = vld [vmem:[%s0 + $0x8] sm:$0xff]
    %v29 = vld [vmem:[%s0 + $0x10] sm:$0xff]
    %v30 = vld [vmem:[%s0 + $0x18] sm:$0xff]
    %v31 = vlaneseq
    %v32 = vand.u32 %v31, 127
    %vm33 = vcmp.lt.s32.totalorder %v32, 72
    %34 = vadd.xlane.f32.xlu0 %v27
    %v35 = vpop.xlane.xlu0 %34
    %36 = vadd.xlane.f32.xlu0 %v28
    %v37 = vpop.xlane.xlu0 %36
    %38 = vadd.xlane.f32.xlu0 %v29
    %v39 = vpop.xlane.xlu0 %38
    %40 = vadd.xlane.f32.xlu0 %v30
    %v41 = vpop.xlane.xlu0 %40
    %v42 = vmul.f32 %v35, 0.013888889
    %v43 = vmul.f32 %v37, 0.013888889
    %v44 = vmul.f32 %v39, 0.013888889
    %v45 = vmul.f32 %v41, 0.013888889
    %v46 = vsub.f32 %v27, %v42
    %v47 = vsub.f32 %v28, %v43
    %v48 = vsub.f32 %v29, %v44
    %v49 = vsub.f32 %v30, %v45
    %v50 = vsel %vm33, %v46, 0.0
    %v51 = vsel %vm33, %v47, 0.0
    %v52 = vsel %vm33, %v48, 0.0
    %v53 = vsel %vm33, %v49, 0.0
    %v54 = vmul.f32 %v50, %v50
    %v55 = vmul.f32 %v51, %v51
    %v56 = vmul.f32 %v52, %v52
    %v57 = vmul.f32 %v53, %v53
    %58 = vadd.xlane.f32.xlu0 %v54
    %v59 = vpop.xlane.xlu0 %58
    %60 = vadd.xlane.f32.xlu0 %v55
    %v61 = vpop.xlane.xlu0 %60
    %62 = vadd.xlane.f32.xlu0 %v56
    %v63 = vpop.xlane.xlu0 %62
    %64 = vadd.xlane.f32.xlu0 %v57
    %v65 = vpop.xlane.xlu0 %64
    %v66 = vmul.f32 %v59, 0.013888889
    %v67 = vmul.f32 %v61, 0.013888889
    %v68 = vmul.f32 %v63, 0.013888889
    %v69 = vmul.f32 %v65, 0.013888889
    %v70 = vadd.f32 %v66, 1e-05
    %v71 = vadd.f32 %v67, 1e-05
    %v72 = vadd.f32 %v68, 1e-05
    %v73 = vadd.f32 %v69, 1e-05
    %v74 = vrsqrt.pop %v70
    %v75 = vmul.f32 %v74, %v70
    %v76 = vmul.f32 %v75, %v74
    %v77 = vmul.f32 0.5, %v76
    %v78 = vsub.f32 1.5, %v77
    %v79 = vmul.f32 %v74, %v78
    %vm80 = vweird.f32 %v70
    %vm81 = vweird.f32 %v74
    %vm82 = vmor %vm80, %vm81
    %v83 = vsel %vm82, %v74, %v79
    %v84 = vrsqrt.pop %v71
    %v85 = vmul.f32 %v84, %v71
    %v86 = vmul.f32 %v85, %v84
    %v87 = vmul.f32 0.5, %v86
    %v88 = vsub.f32 1.5, %v87
    %v89 = vmul.f32 %v84, %v88
    %vm90 = vweird.f32 %v71
    %vm91 = vweird.f32 %v84
    %vm92 = vmor %vm90, %vm91
    %v93 = vsel %vm92, %v84, %v89
    %v94 = vrsqrt.pop %v72
    %v95 = vmul.f32 %v94, %v72
    %v96 = vmul.f32 %v95, %v94
    %v97 = vmul.f32 0.5, %v96
    %v98 = vsub.f32 1.5, %v97
    %v99 = vmul.f32 %v94, %v98
    %vm100 = vweird.f32 %v72
    %vm101 = vweird.f32 %v94
    %vm102 = vmor %vm100, %vm101
    %v103 = vsel %vm102, %v94, %v99
    %v104 = vrsqrt.pop %v73
    %v105 = vmul.f32 %v104, %v73
    %v106 = vmul.f32 %v105, %v104
    %v107 = vmul.f32 0.5, %v106
    %v108 = vsub.f32 1.5, %v107
    %v109 = vmul.f32 %v104, %v108
    %vm110 = vweird.f32 %v73
    %vm111 = vweird.f32 %v104
    %vm112 = vmor %vm110, %vm111
    %v113 = vsel %vm112, %v104, %v109
    %v114 = vmul.f32 %v50, %v83
    %v115 = vmul.f32 %v51, %v93
    %v116 = vmul.f32 %v52, %v103
    %v117 = vmul.f32 %v53, %v113
    %v118 = vld [vmem:[%s1] sm:$0x1]
    %v120 = vperm.slane %v118, 0
    %v122 = vmul.f32 %v114, %v120
    %v123 = vmul.f32 %v115, %v120
    %v124 = vmul.f32 %v116, %v120
    %v125 = vmul.f32 %v117, %v120
    %v126 = vld [vmem:[%s2] sm:$0x1]
    %v128 = vperm.slane %v126, 0
    %v130 = vadd.f32 %v122, %v128
    %v131 = vadd.f32 %v123, %v128
    %v132 = vadd.f32 %v124, %v128
    %v133 = vadd.f32 %v125, %v128
    %v134 = vld [vmem:[%s3] sm:$0xff]
    %v135 = vld [vmem:[%s3 + $0x8] sm:$0xff]
    %v136 = vld [vmem:[%s3 + $0x10] sm:$0xff]
    %v137 = vld [vmem:[%s3 + $0x18] sm:$0xff]
    %v138 = vld [vmem:[%s3 + $0x20] sm:$0xff]
    %v139 = vld [vmem:[%s3 + $0x28] sm:$0xff]
    %v140 = vld [vmem:[%s3 + $0x30] sm:$0xff]
    %v141 = vld [vmem:[%s3 + $0x38] sm:$0xff]
    %v142 = vld [vmem:[%s3 + $0x40] sm:$0xff]
    %v143 = vld [vmem:[%s3 + $0x48] sm:$0xff]
    %v144 = vld [vmem:[%s3 + $0x50] sm:$0xff]
    %v145 = vld [vmem:[%s3 + $0x58] sm:$0xff]
    %v146 = vld [vmem:[%s3 + $0x60] sm:$0xff]
    %v147 = vld [vmem:[%s3 + $0x68] sm:$0xff]
    %v148 = vld [vmem:[%s3 + $0x70] sm:$0xff]
    %v149 = vld [vmem:[%s3 + $0x78] sm:$0xff]
    %v150 = vld [vmem:[%s3 + $0x80] sm:$0xff]
    %v151 = vld [vmem:[%s3 + $0x88] sm:$0xff]
    %v152 = vld [vmem:[%s3 + $0x90] sm:$0xff]
    %v153 = vld [vmem:[%s3 + $0x98] sm:$0xff]
    %v154 = vld [vmem:[%s3 + $0xa0] sm:$0xff]
    %v155 = vld [vmem:[%s3 + $0xa8] sm:$0xff]
    %v156 = vld [vmem:[%s3 + $0xb0] sm:$0xff]
    %v157 = vld [vmem:[%s3 + $0xb8] sm:$0xff]
    %v158 = vld [vmem:[%s3 + $0xc0] sm:$0xff]
    %v159 = vld [vmem:[%s3 + $0xc8] sm:$0xff]
    %v160 = vld [vmem:[%s3 + $0xd0] sm:$0xff]
    %v161 = vld [vmem:[%s3 + $0xd8] sm:$0xff]
    %v162 = vld [vmem:[%s3 + $0xe0] sm:$0xff]
    %v163 = vld [vmem:[%s3 + $0xe8] sm:$0xff]
    %v164 = vld [vmem:[%s3 + $0xf0] sm:$0xff]
    %v165 = vld [vmem:[%s3 + $0xf8] sm:$0xff]
    %v166 = vld [vmem:[%s4] sm:$0x3]
    %v168 = vperm.slane %v166, 0
    %v169 = vperm.slane %v166, 1
    %172 = vmatpush.msra.mxu0 %v164
    %173 = vmatpush.msra.mxu0 %v162
    %174 = vmatpush.msra.mxu0 %v160
    %175 = vmatpush.msra.mxu0 %v158
    %176 = vmatpush.msra.mxu0 %v156
    %177 = vmatpush.msra.mxu0 %v154
    %178 = vmatpush.msra.mxu0 %v152
    %179 = vmatpush.msra.mxu0 %v150
    %180 = vmatpush.msra.mxu0 %v148
    %181 = vmatpush.msra.mxu0 %v146
    %182 = vmatpush.msra.mxu0 %v144
    %183 = vmatpush.msra.mxu0 %v142
    %184 = vmatpush.msra.mxu0 %v140
    %185 = vmatpush.msra.mxu0 %v138
    %186 = vmatpush.msra.mxu0 %v136
    %187 = vmatpush.msra.mxu0 %v134
    %188 = vmatmul.f32.gmra.mxu0 %v130
    %v189 = vpop.f32.mrf.mxu0
    %v190 = vadd.f32 %v168, %v189
    %191 = vmatmul.f32.gmra.mxu0 %v131
    %v192 = vpop.f32.mrf.mxu0
    %v193 = vadd.f32 %v168, %v192
    %194 = vmatmul.f32.gmra.mxu0 %v132
    %v195 = vpop.f32.mrf.mxu0
    %v196 = vadd.f32 %v168, %v195
    %197 = vmatmul.f32.gmra.mxu0 %v133
    %v198 = vpop.f32.mrf.mxu0
    %v199 = vadd.f32 %v168, %v198
    %200 = vdwg.mxu0
    %201 = vmatpush.msra.mxu0 %v165
    %202 = vmatpush.msra.mxu0 %v163
    %203 = vmatpush.msra.mxu0 %v161
    %204 = vmatpush.msra.mxu0 %v159
    %205 = vmatpush.msra.mxu0 %v157
    %206 = vmatpush.msra.mxu0 %v155
    %207 = vmatpush.msra.mxu0 %v153
    %208 = vmatpush.msra.mxu0 %v151
    %209 = vmatpush.msra.mxu0 %v149
    %210 = vmatpush.msra.mxu0 %v147
    %211 = vmatpush.msra.mxu0 %v145
    %212 = vmatpush.msra.mxu0 %v143
    %213 = vmatpush.msra.mxu0 %v141
    %214 = vmatpush.msra.mxu0 %v139
    %215 = vmatpush.msra.mxu0 %v137
    %216 = vmatpush.msra.mxu0 %v135
    %217 = vmatmul.f32.gmra.mxu0 %v130
    %v218 = vpop.f32.mrf.mxu0
    %v219 = vadd.f32 %v169, %v218
    %220 = vmatmul.f32.gmra.mxu0 %v131
    %v221 = vpop.f32.mrf.mxu0
    %v222 = vadd.f32 %v169, %v221
    %223 = vmatmul.f32.gmra.mxu0 %v132
    %v224 = vpop.f32.mrf.mxu0
    %v225 = vadd.f32 %v169, %v224
    %226 = vmatmul.f32.gmra.mxu0 %v133
    %v227 = vpop.f32.mrf.mxu0
    %v228 = vadd.f32 %v169, %v227
    %229 = vdwg.mxu0
    %v230 = vmax.f32 %v190, 0.0
    %v231 = vmax.f32 %v219, 0.0
    %v232 = vmax.f32 %v193, 0.0
    %v233 = vmax.f32 %v222, 0.0
    %v234 = vmax.f32 %v196, 0.0
    %v235 = vmax.f32 %v225, 0.0
    %v236 = vmax.f32 %v199, 0.0
    %v237 = vmax.f32 %v228, 0.0
    %v238 = vld [vmem:[%s5] sm:$0xff]
    %v239 = vld [vmem:[%s5 + $0x8] sm:$0xff]
    %v240 = vld [vmem:[%s5 + $0x10] sm:$0xff]
    %v241 = vld [vmem:[%s5 + $0x18] sm:$0xff]
    %v242 = vld [vmem:[%s5 + $0x20] sm:$0xff]
    %v243 = vld [vmem:[%s5 + $0x28] sm:$0xff]
    %v244 = vld [vmem:[%s5 + $0x30] sm:$0xff]
    %v245 = vld [vmem:[%s5 + $0x38] sm:$0xff]
    %v246 = vld [vmem:[%s5 + $0x40] sm:$0xff]
    %v247 = vld [vmem:[%s5 + $0x48] sm:$0xff]
    %v248 = vld [vmem:[%s5 + $0x50] sm:$0xff]
    %v249 = vld [vmem:[%s5 + $0x58] sm:$0xff]
    %v250 = vld [vmem:[%s5 + $0x60] sm:$0xff]
    %v251 = vld [vmem:[%s5 + $0x68] sm:$0xff]
    %v252 = vld [vmem:[%s5 + $0x70] sm:$0xff]
    %v253 = vld [vmem:[%s5 + $0x78] sm:$0xff]
    %v254 = vld [vmem:[%s5 + $0x80] sm:$0xff]
    %v255 = vld [vmem:[%s5 + $0x88] sm:$0xff]
    %v256 = vld [vmem:[%s5 + $0x90] sm:$0xff]
    %v257 = vld [vmem:[%s5 + $0x98] sm:$0xff]
    %v258 = vld [vmem:[%s5 + $0xa0] sm:$0xff]
    %v259 = vld [vmem:[%s5 + $0xa8] sm:$0xff]
    %v260 = vld [vmem:[%s5 + $0xb0] sm:$0xff]
    %v261 = vld [vmem:[%s5 + $0xb8] sm:$0xff]
    %v262 = vld [vmem:[%s5 + $0xc0] sm:$0xff]
    %v263 = vld [vmem:[%s5 + $0xc8] sm:$0xff]
    %v264 = vld [vmem:[%s5 + $0xd0] sm:$0xff]
    %v265 = vld [vmem:[%s5 + $0xd8] sm:$0xff]
    %v266 = vld [vmem:[%s5 + $0xe0] sm:$0xff]
    %v267 = vld [vmem:[%s5 + $0xe8] sm:$0xff]
    %v268 = vld [vmem:[%s5 + $0xf0] sm:$0xff]
    %v269 = vld [vmem:[%s5 + $0xf8] sm:$0xff]
    %v270 = vld [vmem:[%s6] sm:$0x1]
    %v272 = vperm.slane %v270, 0
    %274 = vmatpush.msra.mxu0 %v253
    %275 = vmatpush.msra.mxu0 %v252
    %276 = vmatpush.msra.mxu0 %v251
    %277 = vmatpush.msra.mxu0 %v250
    %278 = vmatpush.msra.mxu0 %v249
    %279 = vmatpush.msra.mxu0 %v248
    %280 = vmatpush.msra.mxu0 %v247
    %281 = vmatpush.msra.mxu0 %v246
    %282 = vmatpush.msra.mxu0 %v245
    %283 = vmatpush.msra.mxu0 %v244
    %284 = vmatpush.msra.mxu0 %v243
    %285 = vmatpush.msra.mxu0 %v242
    %286 = vmatpush.msra.mxu0 %v241
    %287 = vmatpush.msra.mxu0 %v240
    %288 = vmatpush.msra.mxu0 %v239
    %289 = vmatpush.msra.mxu0 %v238
    %290 = vmatmul.f32.gmra.mxu0 %v230
    %v291 = vpop.f32.mrf.mxu0
    %v292 = vadd.f32 %v272, %v291
    %293 = vmatmul.f32.gmra.mxu0 %v232
    %v294 = vpop.f32.mrf.mxu0
    %v295 = vadd.f32 %v272, %v294
    %296 = vmatmul.f32.gmra.mxu0 %v234
    %v297 = vpop.f32.mrf.mxu0
    %v298 = vadd.f32 %v272, %v297
    %299 = vmatmul.f32.gmra.mxu0 %v236
    %v300 = vpop.f32.mrf.mxu0
    %v301 = vadd.f32 %v272, %v300
    %302 = vdwg.mxu0
    %303 = vmatpush.msra.mxu0 %v269
    %304 = vmatpush.msra.mxu0 %v268
    %305 = vmatpush.msra.mxu0 %v267
    %306 = vmatpush.msra.mxu0 %v266
    %307 = vmatpush.msra.mxu0 %v265
    %308 = vmatpush.msra.mxu0 %v264
    %309 = vmatpush.msra.mxu0 %v263
    %310 = vmatpush.msra.mxu0 %v262
    %311 = vmatpush.msra.mxu0 %v261
    %312 = vmatpush.msra.mxu0 %v260
    %313 = vmatpush.msra.mxu0 %v259
    %314 = vmatpush.msra.mxu0 %v258
    %315 = vmatpush.msra.mxu0 %v257
    %316 = vmatpush.msra.mxu0 %v256
    %317 = vmatpush.msra.mxu0 %v255
    %318 = vmatpush.msra.mxu0 %v254
    %319 = vmatmul.f32.gmra.mxu0 %v231
    %v320 = vpop.f32.mrf.mxu0
    %v321 = vadd.f32 %v292, %v320
    %322 = vmatmul.f32.gmra.mxu0 %v233
    %v323 = vpop.f32.mrf.mxu0
    %v324 = vadd.f32 %v295, %v323
    %325 = vmatmul.f32.gmra.mxu0 %v235
    %v326 = vpop.f32.mrf.mxu0
    %v327 = vadd.f32 %v298, %v326
    %328 = vmatmul.f32.gmra.mxu0 %v237
    %v329 = vpop.f32.mrf.mxu0
    %v330 = vadd.f32 %v301, %v329
    %331 = vdwg.mxu0
    %v332 = vadd.f32 %v321, %v27
    %v333 = vadd.f32 %v324, %v28
    %v334 = vadd.f32 %v327, %v29
    %v335 = vadd.f32 %v330, %v30
    %336 = vst [vmem:[#allocation2] sm:$0xff] %v332
    %337 = vst [vmem:[#allocation2 + $0x8] sm:$0xff] %v333
    %338 = vst [vmem:[#allocation2 + $0x10] sm:$0xff] %v334
    %339 = vst [vmem:[#allocation2 + $0x18] sm:$0xff] %v335
    // Predicated region
    $region30: #{ctdff_ff_block.1} parent=1 // pred_check
      _
    $region31: #{ctdff_ff_block.1} parent=1 // pred_check_branch
      %341 = sbr.rel (0) target = $region33
    $region32: #{ctdff_ff_block.1} parent=1 // pred_region
      %343 = vsyncadd [#allocation3], 0
      %s344 = sshll.u32 [#allocation2], 4
      %s345 = int_to_ptr.vmem [resolvable:$true] %s344
      %s346 = sshll.u32 %s7, 4
      %s347 = int_to_ptr.hbm [resolvable:$true] %s346
      %352 = dma.vmem_to_hbm [thread:$0]  %s345, 512, %s347, [#allocation3], 128, 128, 8
    $region33: #{ctdff_ff_block.1} parent=1 // pred_fallthru
      _
    // Predicated region
    $region34: #{ctdff_ff_block.1} parent=1 // pred_check
      _
    $region35: #{ctdff_ff_block.1} parent=1 // pred_check_branch
      %354 = sbr.rel (0) target = $region37
    $region36: #{ctdff_ff_block.1} parent=1 // pred_region
      %356 = dma.done [#allocation3], 512
    $region37: #{ctdff_ff_block.1} parent=1 // pred_fallthru
      _
    %357 = vsyncpa [#allocation3], 1

</llo_original>
